<compile_context>
chip_gen: v5e
topology: v5e:2x2
jax: 0.10.0
libtpu: 0.0.40
codegen_flags: <defaults>
</compile_context>

<pallas_src>
import jax
import jax.numpy as jnp
from jax.experimental import pallas as pl
from jax.experimental.pallas import tpu as pltpu

BN_EPS = 1e-5
LEAKY_SLOPE = 0.2


def _fc_bn_lrelu_kernel(x_ref, w_ref, p_ref, o_ref):
    # x_ref: (N, in_dim)   full batch, native dtype (fed straight to the MXU)
    # w_ref: (in_dim, tn)  one tile of output features, native dtype
    # p_ref: (2, tn)       row 0 = gamma, row 1 = beta (f32)
    # o_ref: (N, tn)
    y = jnp.dot(x_ref[...], w_ref[...], preferred_element_type=jnp.float32)
    # NOTE: Linear bias intentionally omitted — BN mean-subtraction cancels it.

    # BatchNorm1d, training-mode batch statistics (biased variance).
    # One-pass moments: both reductions run while y is hot in vregs.
    n = y.shape[0]
    inv_n = jnp.float32(1.0 / n)
    s1 = jnp.sum(y, axis=0, keepdims=True)          # (1, tn)
    s2 = jnp.sum(y * y, axis=0, keepdims=True)      # (1, tn)
    mean = s1 * inv_n
    var = jnp.maximum(s2 * inv_n - mean * mean, 0.0)  # clamp cancellation error
    inv_std = jax.lax.rsqrt(var + BN_EPS)

    p = p_ref[...].astype(jnp.float32)
    gamma = p[0:1, :]
    beta = p[1:2, :]

    # Fold BN into a single per-element affine: y * scale + shift.
    scale = gamma * inv_std                          # (1, tn)
    shift = beta - mean * scale                      # (1, tn)
    y_bn = y * scale + shift

    # LeakyReLU(0.2): valid as max(y, 0.2*y) since 0 < slope < 1.
    out = jnp.maximum(y_bn, LEAKY_SLOPE * y_bn)
    o_ref[...] = out.astype(o_ref.dtype)


def _tpu_generation():
    """Best-effort (vmem_capacity_bytes, cores_per_chip) with safe fallbacks."""
    vmem_capacity = 64 * 1024 * 1024   # conservative default (v7x per-TC)
    cores_per_chip = 2                 # conservative: split grid for full util
    try:
        info = pltpu.get_tpu_info()
        cap = getattr(info, "vmem_capacity_bytes", None)
        if cap:
            vmem_capacity = int(cap)
    except Exception:
        pass
    try:
        kind = jax.devices()[0].device_kind.lower()
        # v5e / v6e parts: single TensorCore per chip.
        if ("v5e" in kind) or ("v5 lite" in kind) or ("v5lite" in kind) or ("v6" in kind):
            cores_per_chip = 1
    except Exception:
        pass
    return vmem_capacity, cores_per_chip


def _tile_vmem_bytes(N, in_dim, t, itemsize):
    """Per-grid-step VMEM estimate for a feature tile of width t (excl. x)."""
    return (
        2 * in_dim * t * itemsize   # W tiles (double-buffered)
        + 2 * N * t * itemsize      # output tiles (double-buffered)
        + 2 * 2 * t * 4             # gamma/beta tiles (double-buffered)
        + 3 * N * t * 4             # f32 temps: y, y*y / reductions, bn result
    )


def _select_tile_n(N, in_dim, out_dim, itemsize, *, budget, cores_per_chip):
    """Largest 128-multiple tile dividing out_dim that fits the VMEM budget."""
    x_bytes = N * in_dim * itemsize  # single-buffered, resident across grid
    candidates = [t for t in range(128, out_dim + 1, 128) if out_dim % t == 0]
    assert candidates, "out_dim must be a multiple of 128"

    # Multi-TensorCore chips: keep >= 2 grid steps on the parallel axis so
    # both cores get a share (cost: one extra ~0.35us grid-step overhead).
    if cores_per_chip >= 2 and out_dim >= 256:
        capped = [t for t in candidates if t <= out_dim // 2]
        if capped:
            candidates = capped

    slack = 1.15  # 15% headroom on top of the estimate
    for t in sorted(candidates, reverse=True):
        if (x_bytes + _tile_vmem_bytes(N, in_dim, t, itemsize)) * slack <= budget:
            return t

    raise ValueError(
        "FCBNLeakyReLU Pallas kernel: even the smallest feature tile "
        f"(tile_n={min(candidates)}) plus the VMEM-resident batch "
        f"({x_bytes} bytes) exceeds the VMEM budget ({budget} bytes). "
        "A batch-tiled two-pass BN kernel is required for this shape."
        # TODO(synk): implement the batch-tiled two-pass BN fallback.
    )


def fc_bn_leaky_relu(x, weight, gamma, beta, bias=None, *, tile_n=None):
    """x: (N, in_dim); weight: (in_dim, out_dim); gamma/beta/bias: (out_dim,).

    `bias` is accepted for parity with nn.Linear but is not used: training-mode
    BatchNorm1d subtracts the per-feature batch mean, which cancels it exactly.
    """
    del bias  # mathematically cancelled by BN mean subtraction

    N, in_dim = x.shape
    out_dim = weight.shape[1]
    itemsize = jnp.dtype(x.dtype).itemsize

    vmem_capacity, cores_per_chip = _tpu_generation()
    # Tile-selection budget: ~70% of physical VMEM (v5e/v6e 128 MiB -> ~90 MiB,
    # v7x 64 MiB/TC -> ~45 MiB). Hard limit we request: ~80% of physical.
    budget = int(vmem_capacity * 0.70)
    vmem_ceiling = int(vmem_capacity * 0.80)

    if tile_n is None:
        tile_n = _select_tile_n(N, in_dim, out_dim, itemsize,
                                budget=budget, cores_per_chip=cores_per_chip)
    assert out_dim % tile_n == 0 and tile_n % 128 == 0, \
        "tile_n must be a 128-multiple dividing out_dim"

    # Pack BN affine params into one array -> one DMA stream per grid step.
    params = jnp.stack([gamma, beta], axis=0).astype(jnp.float32)  # (2, out_dim)

    grid = (out_dim // tile_n,)

    # Always set an explicit VMEM limit (v5e's scoped default is only 16 MiB);
    # keep it comfortably above the estimate but below the physical ceiling.
    vmem_bytes = (N * in_dim * itemsize
                  + _tile_vmem_bytes(N, in_dim, tile_n, itemsize))
    vmem_limit = min(vmem_ceiling, max(32 * 1024 * 1024, int(vmem_bytes * 1.5)))

    return pl.pallas_call(
        _fc_bn_lrelu_kernel,
        out_shape=jax.ShapeDtypeStruct((N, out_dim), x.dtype),
        grid_spec=pltpu.PrefetchScalarGridSpec(
            num_scalar_prefetch=0,
            grid=grid,
            in_specs=[
                # x never changes across the grid -> single-buffer it.
                pl.BlockSpec((N, in_dim), lambda j: (0, 0),
                             pipeline_mode=pl.Buffered(1)),
                pl.BlockSpec((in_dim, tile_n), lambda j: (0, j)),  # W tile
                pl.BlockSpec((2, tile_n), lambda j: (0, j)),       # gamma/beta
            ],
            out_specs=pl.BlockSpec((N, tile_n), lambda j: (0, j)),
        ),
        compiler_params=pltpu.CompilerParams(
            dimension_semantics=("parallel",),
            vmem_limit_bytes=vmem_limit,
        ),
    )(x, weight, params)


if __name__ == "__main__":
    # Small shapes consistent with the module: batch=8, in_dim=128, out_dim=256
    N, IN_DIM, OUT_DIM = 8, 128, 256

    key = jax.random.PRNGKey(0)
    kx, kw, kb = jax.random.split(key, 3)

    x = jax.random.normal(kx, (N, IN_DIM), dtype=jnp.float32)

    # Deterministic parameter init (PyTorch-Linear-style uniform bounds)
    bound = 1.0 / (IN_DIM ** 0.5)
    weight = jax.random.uniform(kw, (IN_DIM, OUT_DIM), jnp.float32, -bound, bound)
    bias = jax.random.uniform(kb, (OUT_DIM,), jnp.float32, -bound, bound)
    gamma = jnp.ones((OUT_DIM,), jnp.float32)   # BatchNorm1d default weight
    beta = jnp.zeros((OUT_DIM,), jnp.float32)   # BatchNorm1d default bias

    out = fc_bn_leaky_relu(x, weight, gamma, beta, bias=bias)
    out = jax.block_until_ready(out)

    # Pure-JAX reference INCLUDING the Linear bias — training-mode BN cancels
    # it exactly, so the bias-free kernel must still match.
    y_ref = x @ weight + bias
    mean = jnp.mean(y_ref, axis=0, keepdims=True)
    var = jnp.mean((y_ref - mean) ** 2, axis=0, keepdims=True)
    y_bn = (y_ref - mean) / jnp.sqrt(var + BN_EPS) * gamma + beta
    ref = jnp.where(y_bn > 0, y_bn, LEAKY_SLOPE * y_bn)
    assert jnp.allclose(out, ref, atol=1e-4, rtol=1e-4), "mismatch vs reference"

    print("KERNEL_OK")
</pallas_src>

<mosaic_0001>
module attributes {stable_mosaic.version = 11 : i64} {
  func.func @_fc_bn_lrelu_kernel(%arg0: i32, %arg1: memref<8x128xf32, #tpu.memory_space<vmem>>, %arg2: memref<128x128xf32, #tpu.memory_space<vmem>>, %arg3: memref<2x128xf32, #tpu.memory_space<vmem>>, %arg4: memref<8x128xf32, #tpu.memory_space<vmem>>) attributes {dimension_semantics = [#tpu.dimension_semantics<parallel>], iteration_bounds = array<i64: 2>, scalar_prefetch = 0 : i64, scratch_operands = 0 : i64, tpu.core_type = #tpu.core_type<tc>, window_params = [{pipeline_mode = #tpu.pipeline_mode<synchronous>, transform_indices = @transform_0, window_bounds = array<i64: 8, 128>}, {transform_indices = @transform_1, window_bounds = array<i64: 128, 128>}, {transform_indices = @transform_2, window_bounds = array<i64: 2, 128>}, {transform_indices = @transform_3, window_bounds = array<i64: 8, 128>}]} {
    %c0 = arith.constant 0 : index
    %c0_0 = arith.constant 0 : index
    %0 = vector.load %arg1[%c0, %c0_0] : memref<8x128xf32, #tpu.memory_space<vmem>>, vector<8x128xf32>
    %c0_1 = arith.constant 0 : index
    %c0_2 = arith.constant 0 : index
    %1 = vector.load %arg2[%c0_1, %c0_2] : memref<128x128xf32, #tpu.memory_space<vmem>>, vector<128x128xf32>
    %cst = arith.constant dense<0.000000e+00> : vector<8x128xf32>
    %2 = tpu.matmul %0, %1, %cst {dimension_numbers = #tpu.dot_dimension_numbers<[1], [0], [0], [1], [0, 0, 1, 1], [], []>} : vector<8x128xf32>, vector<128x128xf32>, vector<8x128xf32> -> vector<8x128xf32>
    %cst_3 = arith.constant dense<0.000000e+00> : vector<128xf32>
    %3 = vector.multi_reduction <add>, %2, %cst_3 [0] : vector<8x128xf32> to vector<128xf32>
    %4 = vector.shape_cast %3 : vector<128xf32> to vector<1x128xf32>
    %5 = arith.mulf %2, %2 : vector<8x128xf32>
    %cst_4 = arith.constant dense<0.000000e+00> : vector<128xf32>
    %6 = vector.multi_reduction <add>, %5, %cst_4 [0] : vector<8x128xf32> to vector<128xf32>
    %7 = vector.shape_cast %6 : vector<128xf32> to vector<1x128xf32>
    %cst_5 = arith.constant 1.250000e-01 : f32
    %8 = vector.broadcast %cst_5 : f32 to vector<1x128xf32>
    %9 = arith.mulf %4, %8 : vector<1x128xf32>
    %cst_6 = arith.constant 1.250000e-01 : f32
    %10 = vector.broadcast %cst_6 : f32 to vector<1x128xf32>
    %11 = arith.mulf %7, %10 : vector<1x128xf32>
    %12 = arith.mulf %9, %9 : vector<1x128xf32>
    %13 = arith.subf %11, %12 : vector<1x128xf32>
    %cst_7 = arith.constant 0.000000e+00 : f32
    %14 = vector.broadcast %cst_7 : f32 to vector<1x128xf32>
    %15 = arith.maximumf %13, %14 : vector<1x128xf32>
    %cst_8 = arith.constant 9.99999974E-6 : f32
    %16 = vector.broadcast %cst_8 : f32 to vector<1x128xf32>
    %17 = arith.addf %15, %16 : vector<1x128xf32>
    %18 = math.rsqrt %17 : vector<1x128xf32>
    %c0_9 = arith.constant 0 : index
    %c0_10 = arith.constant 0 : index
    %19 = vector.load %arg3[%c0_9, %c0_10] : memref<2x128xf32, #tpu.memory_space<vmem>>, vector<2x128xf32>
    %20 = vector.extract_strided_slice %19 {offsets = [0, 0], sizes = [1, 128], strides = [1, 1]} : vector<2x128xf32> to vector<1x128xf32>
    %21 = vector.extract_strided_slice %19 {offsets = [1, 0], sizes = [1, 128], strides = [1, 1]} : vector<2x128xf32> to vector<1x128xf32>
    %22 = arith.mulf %20, %18 : vector<1x128xf32>
    %23 = arith.mulf %9, %22 : vector<1x128xf32>
    %24 = arith.subf %21, %23 : vector<1x128xf32>
    %25 = vector.broadcast %22 : vector<1x128xf32> to vector<8x128xf32>
    %26 = arith.mulf %2, %25 : vector<8x128xf32>
    %27 = vector.broadcast %24 : vector<1x128xf32> to vector<8x128xf32>
    %28 = arith.addf %26, %27 : vector<8x128xf32>
    %cst_11 = arith.constant 2.000000e-01 : f32
    %29 = vector.broadcast %cst_11 : f32 to vector<8x128xf32>
    %30 = arith.mulf %29, %28 : vector<8x128xf32>
    %31 = arith.maximumf %28, %30 : vector<8x128xf32>
    %c0_12 = arith.constant 0 : index
    %c0_13 = arith.constant 0 : index
    %32 = vector.load %arg4[%c0_12, %c0_13] : memref<8x128xf32, #tpu.memory_space<vmem>>, vector<8x128xf32>
    tpu.vector_store %arg4[%c0_12, %c0_13], %31 {strides = array<i32>} : memref<8x128xf32, #tpu.memory_space<vmem>>, vector<8x128xf32>,
    return
  }
  func.func @transform_0(%arg0: i32) -> (i32, i32) {
    %c0_i32 = arith.constant 0 : i32
    %c0_i32_0 = arith.constant 0 : i32
    %c0_i32_1 = arith.constant 0 : i32
    return %c0_i32, %c0_i32_0 : i32, i32
  }
  func.func @transform_1(%arg0: i32) -> (i32, i32) {
    %c0_i32 = arith.constant 0 : i32
    %c0_i32_0 = arith.constant 0 : i32
    return %c0_i32, %arg0 : i32, i32
  }
  func.func @transform_2(%arg0: i32) -> (i32, i32) {
    %c0_i32 = arith.constant 0 : i32
    %c0_i32_0 = arith.constant 0 : i32
    return %c0_i32, %arg0 : i32, i32
  }
  func.func @transform_3(%arg0: i32) -> (i32, i32) {
    %c0_i32 = arith.constant 0 : i32
    %c0_i32_0 = arith.constant 0 : i32
    return %c0_i32, %arg0 : i32, i32
  }
}

</mosaic_0001>

<llo_original>
// kernel: tpu_custom_call.1
$region0: #{tpu_custom_call.1}
  #allocation0 [shape = 'u32[]', space=smem, size = 0x4, offset = 0x4, fixed_abs, tag = 'smem constant byte address 0x4 - core index']
  #allocation1 [shape = 'u32[72,128]{1,0:T(1,128)}', space=vmem, size = 0x9000, scoped, tag = 'internal scratch']
  %s0 = inlined_call_operand.hbm [shape: f32[8,128], index: 0, kind: input, shape index: {}]
  %s1 = inlined_call_operand.hbm [shape: f32[128,256], index: 1, kind: input, shape index: {}]
  %s2 = inlined_call_operand.hbm [shape: f32[2,256], index: 2, kind: input, shape index: {}]
  %s3 = inlined_call_operand.hbm [shape: f32[8,256], index: 3, kind: output, shape index: {}]
  %s4 = sld [smem:[#allocation0]]
  $region57: #{tpu_custom_call.1} parent=0
    _
  %s6 = ssub.s32 1, %s4
  %s7 = scalar_select 0, %s6, %s4
  $region1: #{tpu_custom_call.1} parent=0
    #allocation2 [shape = 'u8[4096]{0}', space=vmem, size = 0x1000, scoped, tag = 'input window, operand 0, single buffered']
    #allocation3 [shape = 's32[2]{0}', space=sflag, size = 0x8, scoped, tag = 'scoped memory for tpu_custom_call.1']
    #allocation4 [shape = 's32[2]{0}', space=sflag, size = 0x8, scoped, tag = 'scoped memory for tpu_custom_call.1']
    #allocation5 [shape = 'u8[131072]{0}', space=vmem, size = 0x20000, scoped, tag = 'input window, operand 1']
    #allocation6 [shape = 's32[2]{0}', space=sflag, size = 0x8, scoped, tag = 'scoped memory for tpu_custom_call.1']
    #allocation7 [shape = 'u8[2048]{0}', space=vmem, size = 0x800, scoped, tag = 'input window, operand 2']
    #allocation8 [shape = 'u8[8192]{0}', space=vmem, size = 0x2000, scoped, tag = 'output window, operand 0']
    %8 = vsyncpa [#allocation3], 0
    %9 = vsyncpa [#allocation6], 0
    %s10 = scalar_lea.sflag [#allocation6], 1
    %11 = vsyncpa %s10, 0
    %12 = vsyncpa [#allocation4], 0
    %s13 = scalar_lea.sflag [#allocation4], 1
    %14 = vsyncpa %s13, 0
    loop: start=0, step=1, limit=4
    $region2: #{tpu_custom_call.1} parent=1 // loop_pre_header
      _
    $region3: #{tpu_custom_call.1} parent=1 // loop_header
      %s16 = sphi 0, %s20
      %p17 = scmp.ge.s32.totalorder %s16, 4
      %s24 = sphi 0, %s24
      %s26 = sphi 0, %s24
      %s27 = sphi 0, %s26
      %s41 = sphi 0, %s27
      %s47 = sphi 0, %s49
      %s50 = sphi 0, %s47
      %s51 = sphi 0, %s50
      %s67 = sphi 0, %s51
      %s73 = sphi 0, %s75
      %s76 = sphi 0, %s73
      %s77 = sphi 0, %s76
      %s93 = sphi 0, %s77
      %s99 = sphi 0, %s101
      %s102 = sphi 0, %s99
      %s103 = sphi 0, %s102
      %s119 = sphi 0, %s103
    $region4: #{tpu_custom_call.1} parent=1 // loop_header_branch
      %19 = sbr.rel (%p17) target = $region8
    $region5: #{tpu_custom_call.1} parent=1 // loop_body
      %s21 = ssub.s32 %s16, 1
      %s22 = ssub.s32 %s16, 2
      %s23 = sadd.s32 %s16, 1
      %s25 = sadd.s32 %s24, 1
      %p28 = scmp.eq.s32.totalorder %s16, 1
      %p29 = scmp.ne.s32.totalorder %s24, %s26
      %p30 = scmp.eq.s32.totalorder %s16, 0
      %p31 = por %p29, %p30
      %p32 = scmp.ne.s32.totalorder %s24, %s26
      %p33 = scmp.eq.s32.totalorder %s21, 1
      %p34 = por %p32, %p33
      %p35 = scmp.ne.s32.totalorder %s26, %s27
      %p36 = scmp.eq.s32.totalorder %s21, 0
      %p37 = por %p35, %p36
      %p38 = scmp.ne.s32.totalorder %s26, %s27
      %p39 = scmp.eq.s32.totalorder %s22, 1
      %p40 = por %p38, %p39
      %p42 = scmp.ne.s32.totalorder %s27, %s41
      %p43 = scmp.eq.s32.totalorder %s22, 0
      %p44 = por %p42, %p43
      %s45 = ssub.s32 %s16, %s23
      %p46 = scmp.eq.s32.totalorder %s45, 0
      %s48 = sadd.s32 %s47, 1
      %s49 = scalar_select %p46, %s47, %s48
      %p52 = pneg %p46
      %p53 = scmp.eq.s32.totalorder %s16, 1
      %p54 = por %p52, %p53
      %p55 = scmp.ne.s32.totalorder %s47, %s50
      %p56 = scmp.eq.s32.totalorder %s16, 0
      %p57 = por %p55, %p56
      %p58 = scmp.ne.s32.totalorder %s47, %s50
      %p59 = scmp.eq.s32.totalorder %s21, 1
      %p60 = por %p58, %p59
      %p61 = scmp.ne.s32.totalorder %s50, %s51
      %p62 = scmp.eq.s32.totalorder %s21, 0
      %p63 = por %p61, %p62
      %p64 = scmp.ne.s32.totalorder %s50, %s51
      %p65 = scmp.eq.s32.totalorder %s22, 1
      %p66 = por %p64, %p65
      %p68 = scmp.ne.s32.totalorder %s51, %s67
      %p69 = scmp.eq.s32.totalorder %s22, 0
      %p70 = por %p68, %p69
      %s71 = ssub.s32 %s16, %s23
      %p72 = scmp.eq.s32.totalorder %s71, 0
      %s74 = sadd.s32 %s73, 1
      %s75 = scalar_select %p72, %s73, %s74
      %p78 = pneg %p72
      %p79 = scmp.eq.s32.totalorder %s16, 1
      %p80 = por %p78, %p79
      %p81 = scmp.ne.s32.totalorder %s73, %s76
      %p82 = scmp.eq.s32.totalorder %s16, 0
      %p83 = por %p81, %p82
      %p84 = scmp.ne.s32.totalorder %s73, %s76
      %p85 = scmp.eq.s32.totalorder %s21, 1
      %p86 = por %p84, %p85
      %p87 = scmp.ne.s32.totalorder %s76, %s77
      %p88 = scmp.eq.s32.totalorder %s21, 0
      %p89 = por %p87, %p88
      %p90 = scmp.ne.s32.totalorder %s76, %s77
      %p91 = scmp.eq.s32.totalorder %s22, 1
      %p92 = por %p90, %p91
      %p94 = scmp.ne.s32.totalorder %s77, %s93
      %p95 = scmp.eq.s32.totalorder %s22, 0
      %p96 = por %p94, %p95
      %s97 = ssub.s32 %s16, %s23
      %p98 = scmp.eq.s32.totalorder %s97, 0
      %s100 = sadd.s32 %s99, 1
      %s101 = scalar_select %p98, %s99, %s100
      %p104 = pneg %p98
      %p105 = scmp.eq.s32.totalorder %s16, 1
      %p106 = por %p104, %p105
      %p107 = scmp.ne.s32.totalorder %s99, %s102
      %p108 = scmp.eq.s32.totalorder %s16, 0
      %p109 = por %p107, %p108
      %p110 = scmp.ne.s32.totalorder %s99, %s102
      %p111 = scmp.eq.s32.totalorder %s21, 1
      %p112 = por %p110, %p111
      %p113 = scmp.ne.s32.totalorder %s102, %s103
      %p114 = scmp.eq.s32.totalorder %s21, 0
      %p115 = por %p113, %p114
      %p116 = scmp.ne.s32.totalorder %s102, %s103
      %p117 = scmp.eq.s32.totalorder %s22, 1
      %p118 = por %p116, %p117
      %p120 = scmp.ne.s32.totalorder %s103, %s119
      %p121 = scmp.eq.s32.totalorder %s22, 0
      %p122 = por %p120, %p121
      %p123 = scmp.le.s32.totalorder 1, %s16
      %p124 = scmp.lt.s32.totalorder %s16, 3
      %p125 = pnand %p123, %p124
      %p126 = pneg %p125
      // Predicated region
      $region9: #{tpu_custom_call.1} parent=5 // pred_check
        _
      $region10: #{tpu_custom_call.1} parent=5 // pred_check_branch
        %128 = sbr.rel (%p125) target = $region12
      $region11: #{tpu_custom_call.1} parent=5 // pred_region
        %s129 = ssub.s32 %s16, 1
        // Predicated region
        $region13: #{tpu_custom_call.1} parent=11 // pred_check
          %p130 = pneg %p37
        $region14: #{tpu_custom_call.1} parent=11 // pred_check_branch
          %132 = sbr.rel (%p130) target = $region16
        $region15: #{tpu_custom_call.1} parent=11 // pred_region
          %134 = vsyncadd [#allocation3], 0
          %s136 = sshll.u32 %s0, 4
          %s137 = int_to_ptr.hbm [resolvable:$true] %s136
          %s138 = sshll.u32 [#allocation2], 4
          %s139 = int_to_ptr.vmem [resolvable:$true] %s138
          %141 = dma.hbm_to_vmem [thread:$0]  %s137, 128, %s139, [#allocation3]
        $region16: #{tpu_custom_call.1} parent=11 // pred_fallthru
          _
      $region12: #{tpu_custom_call.1} parent=5 // pred_fallthru
        _
      %p142 = scmp.lt.s32.totalorder %s16, 2
      // Predicated region
      $region17: #{tpu_custom_call.1} parent=5 // pred_check
        %p143 = pneg %p142
      $region18: #{tpu_custom_call.1} parent=5 // pred_check_branch
        %145 = sbr.rel (%p143) target = $region20
      $region19: #{tpu_custom_call.1} parent=5 // pred_region
        // Predicated region
        $region21: #{tpu_custom_call.1} parent=19 // pred_check
          %p146 = pneg %p57
        $region22: #{tpu_custom_call.1} parent=19 // pred_check_branch
          %148 = sbr.rel (%p146) target = $region24
        $region23: #{tpu_custom_call.1} parent=19 // pred_region
          %s149 = sand.u32 %s16, 1
          %s150 = scalar_lea.sflag [#allocation6], %s149
          %s151 = sand.u32 %s47, 1
          %s152 = smul.addr %s151, 128
          %s153 = scalar_lea.vmem [#allocation5], %s152
          %155 = vsyncadd %s150, 0
          %s156 = smul.addr %s16, 8
          %s157 = scalar_lea.hbm %s1, %s156
          %s158 = sshll.u32 %s157, 4
          %s159 = int_to_ptr.hbm [resolvable:$true] %s158
          %s160 = sshll.u32 %s153, 4
          %s161 = int_to_ptr.vmem [resolvable:$true] %s160
          %166 = dma.hbm_to_vmem [thread:$0]  %s159, 2048, %s161, %s150, 256, 128, 8
        $region24: #{tpu_custom_call.1} parent=19 // pred_fallthru
          _
        // Predicated region
        $region25: #{tpu_custom_call.1} parent=19 // pred_check
          %p167 = pneg %p83
        $region26: #{tpu_custom_call.1} parent=19 // pred_check_branch
          %169 = sbr.rel (%p167) target = $region28
        $region27: #{tpu_custom_call.1} parent=19 // pred_region
          %s170 = sand.u32 %s16, 1
          %s171 = scalar_lea.sflag [#allocation6], %s170
          %s172 = sand.u32 %s73, 1
          %s173 = smul.addr %s172, 2
          %s174 = scalar_lea.vmem [#allocation7], %s173
          %176 = vsyncadd %s171, 0
          %s177 = smul.addr %s16, 2
          %s178 = scalar_lea.hbm %s2, %s177
          %s180 = sshll.u32 %s178, 4
          %s181 = int_to_ptr.hbm [resolvable:$true] %s180
          %s182 = sshll.u32 %s174, 4
          %s183 = int_to_ptr.vmem [resolvable:$true] %s182
          %185 = dma.hbm_to_vmem [thread:$0]  %s181, 32, %s183, %s171
        $region28: #{tpu_custom_call.1} parent=19 // pred_fallthru
          _
      $region20: #{tpu_custom_call.1} parent=5 // pred_fallthru
        _
      %p186 = scmp.le.s32.totalorder 1, %s16
      %p187 = scmp.lt.s32.totalorder %s16, 3
      %p188 = pnand %p186, %p187
      %p189 = pneg %p188
      // Predicated region
      $region29: #{tpu_custom_call.1} parent=5 // pred_check
        _
      $region30: #{tpu_custom_call.1} parent=5 // pred_check_branch
        %191 = sbr.rel (%p188) target = $region32
      $region31: #{tpu_custom_call.1} parent=5 // pred_region
        %s192 = ssub.s32 %s16, 1
        // Predicated region
        $region33: #{tpu_custom_call.1} parent=31 // pred_check
          %p193 = pneg %p37
        $region34: #{tpu_custom_call.1} parent=31 // pred_check_branch
          %195 = sbr.rel (%p193) target = $region36
        $region35: #{tpu_custom_call.1} parent=31 // pred_region
          %197 = dma.done [#allocation3], 128
        $region36: #{tpu_custom_call.1} parent=31 // pred_fallthru
          _
        %s198 = sand.u32 %s21, 1
        %s199 = scalar_lea.sflag [#allocation6], %s198
        %s200 = sand.u32 %s50, 1
        %s201 = smul.addr %s200, 128
        %s202 = scalar_lea.vmem [#allocation5], %s201
        // Predicated region
        $region37: #{tpu_custom_call.1} parent=31 // pred_check
          %p203 = pneg %p63
        $region38: #{tpu_custom_call.1} parent=31 // pred_check_branch
          %205 = sbr.rel (%p203) target = $region40
        $region39: #{tpu_custom_call.1} parent=31 // pred_region
          %207 = dma.done %s199, 2048
        $region40: #{tpu_custom_call.1} parent=31 // pred_fallthru
          _
        %s208 = sand.u32 %s21, 1
        %s209 = scalar_lea.sflag [#allocation6], %s208
        %s210 = sand.u32 %s76, 1
        %s211 = smul.addr %s210, 2
        %s212 = scalar_lea.vmem [#allocation7], %s211
        // Predicated region
        $region41: #{tpu_custom_call.1} parent=31 // pred_check
          %p213 = pneg %p89
        $region42: #{tpu_custom_call.1} parent=31 // pred_check_branch
          %215 = sbr.rel (%p213) target = $region44
        $region43: #{tpu_custom_call.1} parent=31 // pred_region
          %217 = dma.done %s209, 32
        $region44: #{tpu_custom_call.1} parent=31 // pred_fallthru
          _
        %p218 = pneg %p37
        %p219 = pneg %p34
        %s220 = sand.u32 %s21, 1
        %s221 = scalar_lea.sflag [#allocation6], %s220
        %s222 = sand.u32 %s50, 1
        %s223 = smul.addr %s222, 128
        %s224 = scalar_lea.vmem [#allocation5], %s223
        %p225 = pneg %p63
        %p226 = pneg %p60
        %s227 = sand.u32 %s21, 1
        %s228 = scalar_lea.sflag [#allocation6], %s227
        %s229 = sand.u32 %s76, 1
        %s230 = smul.addr %s229, 2
        %s231 = scalar_lea.vmem [#allocation7], %s230
        %p232 = pneg %p89
        %p233 = pneg %p86
        %p234 = pneg %p115
        %p235 = pneg %p112
        %s236 = sand.u32 %s102, 1
        %s237 = scalar_lea.sflag [#allocation4], %s236
        %s238 = sand.u32 %s102, 1
        %s239 = smul.addr %s238, 8
        %s240 = scalar_lea.vmem [#allocation8], %s239
        %v241 = vld [vmem:[#allocation2] sm:$0xff]
        %v242 = vld [vmem:[%s202] sm:$0xff]
        %v243 = vld [vmem:[%s202 + $0x8] sm:$0xff]
        %v244 = vld [vmem:[%s202 + $0x10] sm:$0xff]
        %v245 = vld [vmem:[%s202 + $0x18] sm:$0xff]
        %v246 = vld [vmem:[%s202 + $0x20] sm:$0xff]
        %v247 = vld [vmem:[%s202 + $0x28] sm:$0xff]
        %v248 = vld [vmem:[%s202 + $0x30] sm:$0xff]
        %v249 = vld [vmem:[%s202 + $0x38] sm:$0xff]
        %v250 = vld [vmem:[%s202 + $0x40] sm:$0xff]
        %v251 = vld [vmem:[%s202 + $0x48] sm:$0xff]
        %v252 = vld [vmem:[%s202 + $0x50] sm:$0xff]
        %v253 = vld [vmem:[%s202 + $0x58] sm:$0xff]
        %v254 = vld [vmem:[%s202 + $0x60] sm:$0xff]
        %v255 = vld [vmem:[%s202 + $0x68] sm:$0xff]
        %v256 = vld [vmem:[%s202 + $0x70] sm:$0xff]
        %v257 = vld [vmem:[%s202 + $0x78] sm:$0xff]
        %258 = vmatpush.msra.mxu0 %v257
        %259 = vmatpush.msra.mxu0 %v256
        %260 = vmatpush.msra.mxu0 %v255
        %261 = vmatpush.msra.mxu0 %v254
        %262 = vmatpush.msra.mxu0 %v253
        %263 = vmatpush.msra.mxu0 %v252
        %264 = vmatpush.msra.mxu0 %v251
        %265 = vmatpush.msra.mxu0 %v250
        %266 = vmatpush.msra.mxu0 %v249
        %267 = vmatpush.msra.mxu0 %v248
        %268 = vmatpush.msra.mxu0 %v247
        %269 = vmatpush.msra.mxu0 %v246
        %270 = vmatpush.msra.mxu0 %v245
        %271 = vmatpush.msra.mxu0 %v244
        %272 = vmatpush.msra.mxu0 %v243
        %273 = vmatpush.msra.mxu0 %v242
        %274 = vmatmul.f32.gmra.mxu0 %v241
        %v275 = vpop.f32.mrf.mxu0
        %v276 = vadd.f32 0.0, %v275
        %277 = vdwg.mxu0
        %v278 = vrot.slane %v276, 4
        %v279 = vadd.f32 %v276, %v278
        %v280 = vrot.slane %v279, 2
        %v281 = vadd.f32 %v279, %v280
        %v282 = vrot.slane %v281, 1
        %v283 = vadd.f32 %v281, %v282
        %v284 = vmul.f32 %v276, %v276
        %v285 = vrot.slane %v284, 4
        %v286 = vadd.f32 %v284, %v285
        %v287 = vrot.slane %v286, 2
        %v288 = vadd.f32 %v286, %v287
        %v289 = vrot.slane %v288, 1
        %v290 = vadd.f32 %v288, %v289
        %v291 = vmul.f32 %v283, 0.125
        %v292 = vmul.f32 %v290, 0.125
        %v293 = vmul.f32 %v291, %v291
        %v294 = vsub.f32 %v292, %v293
        %v295 = vmax.f32 %v294, 0.0
        %v296 = vadd.f32 %v295, 1e-05
        %v297 = vrsqrt.pop %v296
        %v298 = vmul.f32 %v297, %v296
        %v299 = vmul.f32 %v298, %v297
        %v300 = vmul.f32 0.5, %v299
        %v301 = vsub.f32 1.5, %v300
        %v302 = vmul.f32 %v297, %v301
        %vm303 = vweird.f32 %v296
        %vm304 = vweird.f32 %v297
        %vm305 = vmor %vm303, %vm304
        %v306 = vsel %vm305, %v297, %v302
        %v307 = vld [vmem:[%s212] sm:$0x3]
        %v308 = vmul.f32 %v307, %v306
        %v309 = vmul.f32 %v291, %v308
        %v311 = vrot.slane %v309, 7
        %v313 = vsub.f32 %v307, %v311
        %v314 = vperm.slane %v308, 0
        %v315 = vmul.f32 %v276, %v314
        %v316 = vperm.slane %v313, 1
        %v317 = vadd.f32 %v315, %v316
        %v318 = vmul.f32 %v317, 0.2
        %v319 = vmax.f32 %v317, %v318
        %320 = vst [vmem:[%s240] sm:$0xff] %v319
        %s321 = sand.u32 %s102, 1
        %s322 = scalar_lea.sflag [#allocation4], %s321
        %s323 = sand.u32 %s102, 1
        %s324 = smul.addr %s323, 8
        %s325 = scalar_lea.vmem [#allocation8], %s324
        // Predicated region
        $region45: #{tpu_custom_call.1} parent=31 // pred_check
          %p326 = pneg %p112
        $region46: #{tpu_custom_call.1} parent=31 // pred_check_branch
          %328 = sbr.rel (%p326) target = $region48
        $region47: #{tpu_custom_call.1} parent=31 // pred_region
          %330 = vsyncadd %s322, 0
          %s331 = smul.addr %s21, 8
          %s332 = scalar_lea.hbm %s3, %s331
          %s334 = sshll.u32 %s325, 4
          %s335 = int_to_ptr.vmem [resolvable:$true] %s334
          %s336 = sshll.u32 %s332, 4
          %s337 = int_to_ptr.hbm [resolvable:$true] %s336
          %339 = dma.vmem_to_hbm [thread:$0]  %s335, 128, %s337, %s322
        $region48: #{tpu_custom_call.1} parent=31 // pred_fallthru
          _
      $region32: #{tpu_custom_call.1} parent=5 // pred_fallthru
        _
      %p340 = scmp.le.s32.totalorder 2, %s16
      // Predicated region
      $region49: #{tpu_custom_call.1} parent=5 // pred_check
        %p341 = pneg %p340
      $region50: #{tpu_custom_call.1} parent=5 // pred_check_branch
        %343 = sbr.rel (%p341) target = $region52
      $region51: #{tpu_custom_call.1} parent=5 // pred_region
        %s344 = ssub.s32 %s16, 2
        // Predicated region
        $region53: #{tpu_custom_call.1} parent=51 // pred_check
          %p345 = pneg %p118
        $region54: #{tpu_custom_call.1} parent=51 // pred_check_branch
          %347 = sbr.rel (%p345) target = $region56
        $region55: #{tpu_custom_call.1} parent=51 // pred_region
          %s348 = sand.u32 %s103, 1
          %s349 = scalar_lea.sflag [#allocation4], %s348
          %s350 = sand.u32 %s103, 1
          %s351 = smul.addr %s350, 8
          %s352 = scalar_lea.vmem [#allocation8], %s351
          %354 = dma.done %s349, 128
        $region56: #{tpu_custom_call.1} parent=51 // pred_fallthru
          _
      $region52: #{tpu_custom_call.1} parent=5 // pred_fallthru
        _
    $region6: #{tpu_custom_call.1} parent=1 // loop_footer
      %s20 = sadd.s32 1, %s16
    $region7: #{tpu_custom_call.1} parent=1 // loop_footer_branch
      %15 = sbr.rel target = $region3
    $region8: #{tpu_custom_call.1} parent=1 // loop_exit
      _
    %355 = vsyncpa [#allocation3], 1
    %s356 = scalar_lea.sflag [#allocation3], 1
    %357 = vsyncpa %s356, 1
    %358 = vsyncpa [#allocation6], 1
    %s359 = scalar_lea.sflag [#allocation6], 1
    %360 = vsyncpa %s359, 1
    %361 = vsyncpa [#allocation4], 1
    %s362 = scalar_lea.sflag [#allocation4], 1
    %363 = vsyncpa %s362, 1

</llo_original>
